<compile_context>
chip_gen: v5e
topology: v5e:2x2
jax: 0.10.0
libtpu: 0.0.40
codegen_flags: <defaults>
</compile_context>

<pallas_src>
import jax
import jax.numpy as jnp
from jax.experimental import pallas as pl
from jax.experimental.pallas import tpu as pltpu


def _critic_kernel(xT_ref, w1t_ref, b1_ref, w2_ref, b2_ref, out_ref):
    # xT:  (in_dim, tb)      w1t: (hidden, in_dim)
    # b1:  (hidden, 1)       w2:  (hidden, 1)
    # b2:  (1,) scalar in SMEM                     out: (1, tb)
    in_dim = xT_ref.shape[0]
    x = xT_ref[...].astype(jnp.float32)          # upcast (bf16 input support)
    w1t = w1t_ref[...].astype(jnp.float32)

    # Layer 1: in_dim broadcast-FMAs on the VPU (lane-dense (hidden, tb) h).
    h = w1t[:, 0:1] * x[0:1, :]
    for k in range(1, in_dim):
        h = h + w1t[:, k:k + 1] * x[k:k + 1, :]
    h = jnp.maximum(h + b1_ref[...], 0.0)

    # Layer 2 (128 -> 1): sublane reduce -> already-lane-dense (1, tb) result.
    v = jnp.sum(h * w2_ref[...], axis=0, keepdims=True) + b2_ref[0]
    out_ref[...] = v.astype(out_ref.dtype)


def critic_forward(state, w1, b1, w2, b2, *, block_b: int = 8192,
                   feature_major: bool = False):
    """Pallas Critic forward.

    state: (B, in_dim) (default) or (in_dim, B) if feature_major=True.
    Returns (B, 1) float32 values.

    Note: for very small A2C batches (B up to a few hundred) a single grid
    step cannot hide the fixed kernel/DMA-setup cost; fuse this head into a
    larger kernel (e.g. shared-trunk actor+critic) or use plain XLA there.
    """
    if feature_major:
        in_dim, B = state.shape
    else:
        B, in_dim = state.shape
    hidden = w1.shape[1]

    # Batch tile = lane dim: multiple of 128 lanes.
    padded_b0 = ((B + 127) // 128) * 128
    tb = min(block_b, padded_b0)
    tb = max(128, ((tb + 127) // 128) * 128)
    # v7x megacore: force >= 2 grid blocks for larger batches so both
    # TensorCores get work (no-op on single-TC v5e/v6e).
    if padded_b0 >= 256 and padded_b0 // tb < 2:
        tb = ((padded_b0 // 2 + 127) // 128) * 128
    num_blocks = pl.cdiv(padded_b0, tb)
    padded_b = num_blocks * tb

    # Relayout to feature-major (in_dim, B). For large rollouts callers should
    # pass feature_major=True to avoid this extra HBM pass over the input.
    xT = state if feature_major else state.T
    if padded_b != B:
        xT = jnp.pad(xT, ((0, 0), (0, padded_b - B)))

    w1t = w1.reshape(in_dim, hidden).T            # (hidden, in_dim)
    b1_col = b1.reshape(hidden, 1)                # (hidden, 1)
    w2_col = w2.reshape(hidden, 1)                # (hidden, 1)
    b2_scalar = b2.reshape(1).astype(jnp.float32)

    itemsize = jnp.dtype(xT.dtype).itemsize
    cost = pl.CostEstimate(
        flops=2 * padded_b * hidden * (in_dim + 1),
        transcendentals=0,
        bytes_accessed=padded_b * in_dim * itemsize + padded_b * 4
        + (hidden * (in_dim + 2) + 1) * 4,
    )

    out = pl.pallas_call(
        _critic_kernel,
        out_shape=jax.ShapeDtypeStruct((1, padded_b), jnp.float32),
        grid=(num_blocks,),
        in_specs=[
            pl.BlockSpec((in_dim, tb), lambda i: (0, i)),        # x: batch in lanes
            pl.BlockSpec((hidden, in_dim), lambda i: (0, 0)),    # w1^T: resident
            pl.BlockSpec((hidden, 1), lambda i: (0, 0)),         # b1 column: resident
            pl.BlockSpec((hidden, 1), lambda i: (0, 0)),         # w2 column: resident
            pl.BlockSpec(memory_space=pltpu.MemorySpace.SMEM),   # b2: SMEM scalar
        ],
        out_specs=pl.BlockSpec((1, tb), lambda i: (0, i)),       # lane-dense output
        compiler_params=pltpu.CompilerParams(
            dimension_semantics=("parallel",),
        ),
        cost_estimate=cost,
    )(xT, w1t, b1_col, w2_col, b2_scalar)
    return out[0, :B].reshape(B, 1)


def init_critic_params(key, in_dim: int, hidden: int = 128, init_w: float = 0.003):
    """Deterministic synthetic init mirroring the PyTorch module.

    hidden1: PyTorch nn.Linear default init  U(-1/sqrt(in_dim), +1/sqrt(in_dim))
    out:     initialize_uniformly            U(-0.003, +0.003)
    """
    k1, k2, k3, k4 = jax.random.split(key, 4)
    bound1 = 1.0 / jnp.sqrt(jnp.float32(in_dim))
    w1 = jax.random.uniform(k1, (in_dim, hidden), jnp.float32, -bound1, bound1)
    b1 = jax.random.uniform(k2, (1, hidden), jnp.float32, -bound1, bound1)
    w2 = jax.random.uniform(k3, (hidden, 1), jnp.float32, -init_w, init_w)
    b2 = jax.random.uniform(k4, (1, 1), jnp.float32, -init_w, init_w)
    return w1, b1, w2, b2


if __name__ == "__main__":
    key = jax.random.PRNGKey(0)
    k_params, k_state, k_state2 = jax.random.split(key, 3)

    in_dim, hidden = 4, 128
    w1, b1, w2, b2 = init_critic_params(k_params, in_dim, hidden)

    def ref_forward(s):
        return jnp.maximum(s @ w1 + b1, 0.0) @ w2 + b2

    # Small A2C-style batch (single grid step, heavy padding path).
    state = jax.random.normal(k_state, (8, in_dim), jnp.float32)
    value = jax.block_until_ready(critic_forward(state, w1, b1, w2, b2))
    assert value.shape == (8, 1)
    assert jnp.allclose(value, ref_forward(state), atol=1e-5, rtol=1e-5)

    # Larger batch exercising the multi-block grid, residency and padding.
    state_big = jax.random.normal(k_state2, (300, in_dim), jnp.float32)
    value_big = jax.block_until_ready(
        critic_forward(state_big, w1, b1, w2, b2, block_b=128))
    assert value_big.shape == (300, 1)
    assert jnp.allclose(value_big, ref_forward(state_big), atol=1e-5, rtol=1e-5)

    # Feature-major caller path (no wrapper-side transpose / extra HBM pass).
    value_fm = jax.block_until_ready(
        critic_forward(state_big.T, w1, b1, w2, b2, feature_major=True))
    assert jnp.allclose(value_fm, ref_forward(state_big), atol=1e-5, rtol=1e-5)

    # bf16 state path (upcast to f32 inside the kernel).
    state_bf16 = state_big.astype(jnp.bfloat16)
    value_bf16 = jax.block_until_ready(
        critic_forward(state_bf16, w1, b1, w2, b2))
    assert jnp.allclose(value_bf16, ref_forward(state_bf16.astype(jnp.float32)),
                        atol=1e-4, rtol=1e-4)

    print("KERNEL_OK")
</pallas_src>

<mosaic_0001>
module attributes {stable_mosaic.version = 11 : i64} {
  func.func @_critic_kernel(%arg0: i32, %arg1: memref<4x128xf32, #tpu.memory_space<vmem>>, %arg2: memref<128x4xf32, #tpu.memory_space<vmem>>, %arg3: memref<128x1xf32, #tpu.memory_space<vmem>>, %arg4: memref<128x1xf32, #tpu.memory_space<vmem>>, %arg5: memref<1xf32, #tpu.memory_space<smem>>, %arg6: memref<1x128xf32, #tpu.memory_space<vmem>>) attributes {dimension_semantics = [#tpu.dimension_semantics<parallel>], iteration_bounds = array<i64: 1>, scalar_prefetch = 0 : i64, scratch_operands = 0 : i64, tpu.core_type = #tpu.core_type<tc>, window_params = [{transform_indices = @transform_0, window_bounds = array<i64: 4, 128>}, {pipeline_mode = #tpu.pipeline_mode<synchronous>, transform_indices = @transform_1, window_bounds = array<i64: 128, 4>}, {pipeline_mode = #tpu.pipeline_mode<synchronous>, transform_indices = @transform_2, window_bounds = array<i64: 128, 1>}, {pipeline_mode = #tpu.pipeline_mode<synchronous>, transform_indices = @transform_3, window_bounds = array<i64: 128, 1>}, {transform_indices = @transform_4, window_bounds = array<i64: 1>}, {transform_indices = @transform_5, window_bounds = array<i64: 1, 128>}]} {
    %c0 = arith.constant 0 : index
    %c0_0 = arith.constant 0 : index
    %0 = vector.load %arg1[%c0, %c0_0] : memref<4x128xf32, #tpu.memory_space<vmem>>, vector<4x128xf32>
    %c0_1 = arith.constant 0 : index
    %c0_2 = arith.constant 0 : index
    %1 = vector.load %arg2[%c0_1, %c0_2] : memref<128x4xf32, #tpu.memory_space<vmem>>, vector<128x4xf32>
    %2 = vector.extract_strided_slice %1 {offsets = [0, 0], sizes = [128, 1], strides = [1, 1]} : vector<128x4xf32> to vector<128x1xf32>
    %3 = vector.extract_strided_slice %0 {offsets = [0, 0], sizes = [1, 128], strides = [1, 1]} : vector<4x128xf32> to vector<1x128xf32>
    %4 = vector.broadcast %2 : vector<128x1xf32> to vector<128x128xf32>
    %5 = vector.broadcast %3 : vector<1x128xf32> to vector<128x128xf32>
    %6 = arith.mulf %4, %5 : vector<128x128xf32>
    %7 = vector.extract_strided_slice %1 {offsets = [0, 1], sizes = [128, 1], strides = [1, 1]} : vector<128x4xf32> to vector<128x1xf32>
    %8 = vector.extract_strided_slice %0 {offsets = [1, 0], sizes = [1, 128], strides = [1, 1]} : vector<4x128xf32> to vector<1x128xf32>
    %9 = vector.broadcast %7 : vector<128x1xf32> to vector<128x128xf32>
    %10 = vector.broadcast %8 : vector<1x128xf32> to vector<128x128xf32>
    %11 = arith.mulf %9, %10 : vector<128x128xf32>
    %12 = arith.addf %6, %11 : vector<128x128xf32>
    %13 = vector.extract_strided_slice %1 {offsets = [0, 2], sizes = [128, 1], strides = [1, 1]} : vector<128x4xf32> to vector<128x1xf32>
    %14 = vector.extract_strided_slice %0 {offsets = [2, 0], sizes = [1, 128], strides = [1, 1]} : vector<4x128xf32> to vector<1x128xf32>
    %15 = vector.broadcast %13 : vector<128x1xf32> to vector<128x128xf32>
    %16 = vector.broadcast %14 : vector<1x128xf32> to vector<128x128xf32>
    %17 = arith.mulf %15, %16 : vector<128x128xf32>
    %18 = arith.addf %12, %17 : vector<128x128xf32>
    %19 = vector.extract_strided_slice %1 {offsets = [0, 3], sizes = [128, 1], strides = [1, 1]} : vector<128x4xf32> to vector<128x1xf32>
    %20 = vector.extract_strided_slice %0 {offsets = [3, 0], sizes = [1, 128], strides = [1, 1]} : vector<4x128xf32> to vector<1x128xf32>
    %21 = vector.broadcast %19 : vector<128x1xf32> to vector<128x128xf32>
    %22 = vector.broadcast %20 : vector<1x128xf32> to vector<128x128xf32>
    %23 = arith.mulf %21, %22 : vector<128x128xf32>
    %24 = arith.addf %18, %23 : vector<128x128xf32>
    %c0_3 = arith.constant 0 : index
    %c0_4 = arith.constant 0 : index
    %25 = vector.load %arg3[%c0_3, %c0_4] : memref<128x1xf32, #tpu.memory_space<vmem>>, vector<128x1xf32>
    %26 = vector.broadcast %25 : vector<128x1xf32> to vector<128x128xf32>
    %27 = arith.addf %24, %26 : vector<128x128xf32>
    %cst = arith.constant 0.000000e+00 : f32
    %28 = vector.broadcast %cst : f32 to vector<128x128xf32>
    %29 = arith.maximumf %27, %28 : vector<128x128xf32>
    %c0_5 = arith.constant 0 : index
    %c0_6 = arith.constant 0 : index
    %30 = vector.load %arg4[%c0_5, %c0_6] : memref<128x1xf32, #tpu.memory_space<vmem>>, vector<128x1xf32>
    %31 = vector.broadcast %30 : vector<128x1xf32> to vector<128x128xf32>
    %32 = arith.mulf %29, %31 : vector<128x128xf32>
    %cst_7 = arith.constant dense<0.000000e+00> : vector<128xf32>
    %33 = vector.multi_reduction <add>, %32, %cst_7 [0] : vector<128x128xf32> to vector<128xf32>
    %34 = vector.shape_cast %33 : vector<128xf32> to vector<1x128xf32>
    %c0_8 = arith.constant 0 : index
    %35 = memref.load %arg5[%c0_8] : memref<1xf32, #tpu.memory_space<smem>>
    %36 = vector.broadcast %35 : f32 to vector<1x128xf32>
    %37 = arith.addf %34, %36 : vector<1x128xf32>
    %c0_9 = arith.constant 0 : index
    %c0_10 = arith.constant 0 : index
    %38 = vector.load %arg6[%c0_9, %c0_10] : memref<1x128xf32, #tpu.memory_space<vmem>>, vector<1x128xf32>
    tpu.vector_store %arg6[%c0_9, %c0_10], %37 {strides = array<i32>} : memref<1x128xf32, #tpu.memory_space<vmem>>, vector<1x128xf32>,
    return
  }
  func.func @transform_0(%arg0: i32) -> (i32, i32) {
    %c0_i32 = arith.constant 0 : i32
    %c0_i32_0 = arith.constant 0 : i32
    return %c0_i32, %arg0 : i32, i32
  }
  func.func @transform_1(%arg0: i32) -> (i32, i32) {
    %c0_i32 = arith.constant 0 : i32
    %c0_i32_0 = arith.constant 0 : i32
    %c0_i32_1 = arith.constant 0 : i32
    return %c0_i32, %c0_i32_0 : i32, i32
  }
  func.func @transform_2(%arg0: i32) -> (i32, i32) {
    %c0_i32 = arith.constant 0 : i32
    %c0_i32_0 = arith.constant 0 : i32
    %c0_i32_1 = arith.constant 0 : i32
    return %c0_i32, %c0_i32_0 : i32, i32
  }
  func.func @transform_3(%arg0: i32) -> (i32, i32) {
    %c0_i32 = arith.constant 0 : i32
    %c0_i32_0 = arith.constant 0 : i32
    %c0_i32_1 = arith.constant 0 : i32
    return %c0_i32, %c0_i32_0 : i32, i32
  }
  func.func @transform_4(%arg0: i32) -> i32 {
    %c0_i32 = arith.constant 0 : i32
    %c0_i32_0 = arith.constant 0 : i32
    return %c0_i32 : i32
  }
  func.func @transform_5(%arg0: i32) -> (i32, i32) {
    %c0_i32 = arith.constant 0 : i32
    %c0_i32_0 = arith.constant 0 : i32
    return %c0_i32, %arg0 : i32, i32
  }
}

</mosaic_0001>

<llo_original>
// kernel: tpu_custom_call.1
$region0: #{tpu_custom_call.1}
  #allocation0 [shape = 'u32[]', space=smem, size = 0x4, offset = 0x4, fixed_abs, tag = 'smem constant byte address 0x4 - core index']
  #allocation1 [shape = 'u32[72,128]{1,0:T(1,128)}', space=vmem, size = 0x9000, scoped, tag = 'internal scratch']
  #allocation2 [shape = 'f32[1]{0:T(128)S(6)}', space=smem, size = 0x200, scoped, tag = 'scoped memory for tpu_custom_call.1']
  %s0 = inlined_call_operand.vmem [shape: f32[4,128], index: 0, kind: input, shape index: {}]
  %s1 = inlined_call_operand.vmem [shape: f32[128,4], index: 1, kind: input, shape index: {}]
  %s2 = inlined_call_operand.vmem [shape: f32[128,1], index: 2, kind: input, shape index: {}]
  %s3 = inlined_call_operand.vmem [shape: f32[128,1], index: 3, kind: input, shape index: {}]
  %s4 = inlined_call_operand.<no memory space> [shape: f32[1], index: 4, kind: input, shape index: {}]
  %s5 = inlined_call_operand.hbm [shape: f32[1,128], index: 5, kind: output, shape index: {}]
  %s6 = sld [smem:[#allocation0]]
  $region30: #{tpu_custom_call.1} parent=0
    _
  %s8 = ssub.s32 1, %s6
  %s9 = scalar_select 0, %s8, %s6
  %10 = sst [smem:[#allocation2]] %s4
  $region1: #{tpu_custom_call.1} parent=0
    #allocation3 [shape = 'u8[512]{0}', space=vmem, size = 0x400, scoped, tag = 'output window, operand 0, single buffered']
    #allocation4 [shape = 's32[1]{0}', space=sflag, size = 0x4, scoped, tag = 'scoped memory for tpu_custom_call.1']
    %11 = vsyncpa [#allocation4], 0
    // Predicated region
    $region2: #{tpu_custom_call.1} parent=1 // pred_check
      _
    $region3: #{tpu_custom_call.1} parent=1 // pred_check_branch
      %13 = sbr.rel (0) target = $region5
    $region4: #{tpu_custom_call.1} parent=1 // pred_region
      _
    $region5: #{tpu_custom_call.1} parent=1 // pred_fallthru
      _
    // Predicated region
    $region6: #{tpu_custom_call.1} parent=1 // pred_check
      _
    $region7: #{tpu_custom_call.1} parent=1 // pred_check_branch
      %15 = sbr.rel (0) target = $region9
    $region8: #{tpu_custom_call.1} parent=1 // pred_region
      _
    $region9: #{tpu_custom_call.1} parent=1 // pred_fallthru
      _
    // Predicated region
    $region10: #{tpu_custom_call.1} parent=1 // pred_check
      _
    $region11: #{tpu_custom_call.1} parent=1 // pred_check_branch
      %17 = sbr.rel (0) target = $region13
    $region12: #{tpu_custom_call.1} parent=1 // pred_region
      _
    $region13: #{tpu_custom_call.1} parent=1 // pred_fallthru
      _
    // Predicated region
    $region14: #{tpu_custom_call.1} parent=1 // pred_check
      _
    $region15: #{tpu_custom_call.1} parent=1 // pred_check_branch
      %19 = sbr.rel (0) target = $region17
    $region16: #{tpu_custom_call.1} parent=1 // pred_region
      _
    $region17: #{tpu_custom_call.1} parent=1 // pred_fallthru
      _
    // Predicated region
    $region18: #{tpu_custom_call.1} parent=1 // pred_check
      _
    $region19: #{tpu_custom_call.1} parent=1 // pred_check_branch
      %21 = sbr.rel (0) target = $region21
    $region20: #{tpu_custom_call.1} parent=1 // pred_region
      _
    $region21: #{tpu_custom_call.1} parent=1 // pred_fallthru
      _
    %v22 = vld [vmem:[%s0] sm:$0xf]
    %v23 = vld [vmem:[%s1] sm:$0xff]
    %v24 = vld [vmem:[%s1 + $0x8] sm:$0xff]
    %v25 = vld [vmem:[%s1 + $0x10] sm:$0xff]
    %v26 = vld [vmem:[%s1 + $0x18] sm:$0xff]
    %v27 = vld [vmem:[%s1 + $0x20] sm:$0xff]
    %v28 = vld [vmem:[%s1 + $0x28] sm:$0xff]
    %v29 = vld [vmem:[%s1 + $0x30] sm:$0xff]
    %v30 = vld [vmem:[%s1 + $0x38] sm:$0xff]
    %v31 = vld [vmem:[%s1 + $0x40] sm:$0xff]
    %v32 = vld [vmem:[%s1 + $0x48] sm:$0xff]
    %v33 = vld [vmem:[%s1 + $0x50] sm:$0xff]
    %v34 = vld [vmem:[%s1 + $0x58] sm:$0xff]
    %v35 = vld [vmem:[%s1 + $0x60] sm:$0xff]
    %v36 = vld [vmem:[%s1 + $0x68] sm:$0xff]
    %v37 = vld [vmem:[%s1 + $0x70] sm:$0xff]
    %v38 = vld [vmem:[%s1 + $0x78] sm:$0xff]
    %40 = vset.pattern.permute.xlu0 0
    %41 = vperm.xlu0 %40, %v23
    %v42 = vpop.permute.xlu0 %41
    %45 = vset.pattern.permute.xlu0 0
    %46 = vperm.xlu0 %45, %v24
    %v47 = vpop.permute.xlu0 %46
    %50 = vset.pattern.permute.xlu0 0
    %51 = vperm.xlu0 %50, %v25
    %v52 = vpop.permute.xlu0 %51
    %55 = vset.pattern.permute.xlu0 0
    %56 = vperm.xlu0 %55, %v26
    %v57 = vpop.permute.xlu0 %56
    %60 = vset.pattern.permute.xlu0 0
    %61 = vperm.xlu0 %60, %v27
    %v62 = vpop.permute.xlu0 %61
    %65 = vset.pattern.permute.xlu0 0
    %66 = vperm.xlu0 %65, %v28
    %v67 = vpop.permute.xlu0 %66
    %70 = vset.pattern.permute.xlu0 0
    %71 = vperm.xlu0 %70, %v29
    %v72 = vpop.permute.xlu0 %71
    %75 = vset.pattern.permute.xlu0 0
    %76 = vperm.xlu0 %75, %v30
    %v77 = vpop.permute.xlu0 %76
    %80 = vset.pattern.permute.xlu0 0
    %81 = vperm.xlu0 %80, %v31
    %v82 = vpop.permute.xlu0 %81
    %85 = vset.pattern.permute.xlu0 0
    %86 = vperm.xlu0 %85, %v32
    %v87 = vpop.permute.xlu0 %86
    %90 = vset.pattern.permute.xlu0 0
    %91 = vperm.xlu0 %90, %v33
    %v92 = vpop.permute.xlu0 %91
    %95 = vset.pattern.permute.xlu0 0
    %96 = vperm.xlu0 %95, %v34
    %v97 = vpop.permute.xlu0 %96
    %100 = vset.pattern.permute.xlu0 0
    %101 = vperm.xlu0 %100, %v35
    %v102 = vpop.permute.xlu0 %101
    %105 = vset.pattern.permute.xlu0 0
    %106 = vperm.xlu0 %105, %v36
    %v107 = vpop.permute.xlu0 %106
    %110 = vset.pattern.permute.xlu0 0
    %111 = vperm.xlu0 %110, %v37
    %v112 = vpop.permute.xlu0 %111
    %115 = vset.pattern.permute.xlu0 0
    %116 = vperm.xlu0 %115, %v38
    %v117 = vpop.permute.xlu0 %116
    %v119 = vperm.slane %v22, 0
    %v120 = vmul.f32 %v42, %v119
    %v121 = vmul.f32 %v47, %v119
    %v122 = vmul.f32 %v52, %v119
    %v123 = vmul.f32 %v57, %v119
    %v124 = vmul.f32 %v62, %v119
    %v125 = vmul.f32 %v67, %v119
    %v126 = vmul.f32 %v72, %v119
    %v127 = vmul.f32 %v77, %v119
    %v128 = vmul.f32 %v82, %v119
    %v129 = vmul.f32 %v87, %v119
    %v130 = vmul.f32 %v92, %v119
    %v131 = vmul.f32 %v97, %v119
    %v132 = vmul.f32 %v102, %v119
    %v133 = vmul.f32 %v107, %v119
    %v134 = vmul.f32 %v112, %v119
    %v135 = vmul.f32 %v117, %v119
    %136 = vset.pattern.permute.xlu0 1
    %137 = vperm.xlu0 %136, %v23
    %v138 = vpop.permute.xlu0 %137
    %140 = vset.pattern.permute.xlu0 1
    %141 = vperm.xlu0 %140, %v24
    %v142 = vpop.permute.xlu0 %141
    %144 = vset.pattern.permute.xlu0 1
    %145 = vperm.xlu0 %144, %v25
    %v146 = vpop.permute.xlu0 %145
    %148 = vset.pattern.permute.xlu0 1
    %149 = vperm.xlu0 %148, %v26
    %v150 = vpop.permute.xlu0 %149
    %152 = vset.pattern.permute.xlu0 1
    %153 = vperm.xlu0 %152, %v27
    %v154 = vpop.permute.xlu0 %153
    %156 = vset.pattern.permute.xlu0 1
    %157 = vperm.xlu0 %156, %v28
    %v158 = vpop.permute.xlu0 %157
    %160 = vset.pattern.permute.xlu0 1
    %161 = vperm.xlu0 %160, %v29
    %v162 = vpop.permute.xlu0 %161
    %164 = vset.pattern.permute.xlu0 1
    %165 = vperm.xlu0 %164, %v30
    %v166 = vpop.permute.xlu0 %165
    %168 = vset.pattern.permute.xlu0 1
    %169 = vperm.xlu0 %168, %v31
    %v170 = vpop.permute.xlu0 %169
    %172 = vset.pattern.permute.xlu0 1
    %173 = vperm.xlu0 %172, %v32
    %v174 = vpop.permute.xlu0 %173
    %176 = vset.pattern.permute.xlu0 1
    %177 = vperm.xlu0 %176, %v33
    %v178 = vpop.permute.xlu0 %177
    %180 = vset.pattern.permute.xlu0 1
    %181 = vperm.xlu0 %180, %v34
    %v182 = vpop.permute.xlu0 %181
    %184 = vset.pattern.permute.xlu0 1
    %185 = vperm.xlu0 %184, %v35
    %v186 = vpop.permute.xlu0 %185
    %188 = vset.pattern.permute.xlu0 1
    %189 = vperm.xlu0 %188, %v36
    %v190 = vpop.permute.xlu0 %189
    %192 = vset.pattern.permute.xlu0 1
    %193 = vperm.xlu0 %192, %v37
    %v194 = vpop.permute.xlu0 %193
    %196 = vset.pattern.permute.xlu0 1
    %197 = vperm.xlu0 %196, %v38
    %v198 = vpop.permute.xlu0 %197
    %v200 = vperm.slane %v22, 1
    %v201 = vmul.f32 %v138, %v200
    %v202 = vmul.f32 %v142, %v200
    %v203 = vmul.f32 %v146, %v200
    %v204 = vmul.f32 %v150, %v200
    %v205 = vmul.f32 %v154, %v200
    %v206 = vmul.f32 %v158, %v200
    %v207 = vmul.f32 %v162, %v200
    %v208 = vmul.f32 %v166, %v200
    %v209 = vmul.f32 %v170, %v200
    %v210 = vmul.f32 %v174, %v200
    %v211 = vmul.f32 %v178, %v200
    %v212 = vmul.f32 %v182, %v200
    %v213 = vmul.f32 %v186, %v200
    %v214 = vmul.f32 %v190, %v200
    %v215 = vmul.f32 %v194, %v200
    %v216 = vmul.f32 %v198, %v200
    %v217 = vadd.f32 %v120, %v201
    %v218 = vadd.f32 %v121, %v202
    %v219 = vadd.f32 %v122, %v203
    %v220 = vadd.f32 %v123, %v204
    %v221 = vadd.f32 %v124, %v205
    %v222 = vadd.f32 %v125, %v206
    %v223 = vadd.f32 %v126, %v207
    %v224 = vadd.f32 %v127, %v208
    %v225 = vadd.f32 %v128, %v209
    %v226 = vadd.f32 %v129, %v210
    %v227 = vadd.f32 %v130, %v211
    %v228 = vadd.f32 %v131, %v212
    %v229 = vadd.f32 %v132, %v213
    %v230 = vadd.f32 %v133, %v214
    %v231 = vadd.f32 %v134, %v215
    %v232 = vadd.f32 %v135, %v216
    %233 = vset.pattern.permute.xlu0 2
    %234 = vperm.xlu0 %233, %v23
    %v235 = vpop.permute.xlu0 %234
    %237 = vset.pattern.permute.xlu0 2
    %238 = vperm.xlu0 %237, %v24
    %v239 = vpop.permute.xlu0 %238
    %241 = vset.pattern.permute.xlu0 2
    %242 = vperm.xlu0 %241, %v25
    %v243 = vpop.permute.xlu0 %242
    %245 = vset.pattern.permute.xlu0 2
    %246 = vperm.xlu0 %245, %v26
    %v247 = vpop.permute.xlu0 %246
    %249 = vset.pattern.permute.xlu0 2
    %250 = vperm.xlu0 %249, %v27
    %v251 = vpop.permute.xlu0 %250
    %253 = vset.pattern.permute.xlu0 2
    %254 = vperm.xlu0 %253, %v28
    %v255 = vpop.permute.xlu0 %254
    %257 = vset.pattern.permute.xlu0 2
    %258 = vperm.xlu0 %257, %v29
    %v259 = vpop.permute.xlu0 %258
    %261 = vset.pattern.permute.xlu0 2
    %262 = vperm.xlu0 %261, %v30
    %v263 = vpop.permute.xlu0 %262
    %265 = vset.pattern.permute.xlu0 2
    %266 = vperm.xlu0 %265, %v31
    %v267 = vpop.permute.xlu0 %266
    %269 = vset.pattern.permute.xlu0 2
    %270 = vperm.xlu0 %269, %v32
    %v271 = vpop.permute.xlu0 %270
    %273 = vset.pattern.permute.xlu0 2
    %274 = vperm.xlu0 %273, %v33
    %v275 = vpop.permute.xlu0 %274
    %277 = vset.pattern.permute.xlu0 2
    %278 = vperm.xlu0 %277, %v34
    %v279 = vpop.permute.xlu0 %278
    %281 = vset.pattern.permute.xlu0 2
    %282 = vperm.xlu0 %281, %v35
    %v283 = vpop.permute.xlu0 %282
    %285 = vset.pattern.permute.xlu0 2
    %286 = vperm.xlu0 %285, %v36
    %v287 = vpop.permute.xlu0 %286
    %289 = vset.pattern.permute.xlu0 2
    %290 = vperm.xlu0 %289, %v37
    %v291 = vpop.permute.xlu0 %290
    %293 = vset.pattern.permute.xlu0 2
    %294 = vperm.xlu0 %293, %v38
    %v295 = vpop.permute.xlu0 %294
    %v297 = vperm.slane %v22, 2
    %v298 = vmul.f32 %v235, %v297
    %v299 = vmul.f32 %v239, %v297
    %v300 = vmul.f32 %v243, %v297
    %v301 = vmul.f32 %v247, %v297
    %v302 = vmul.f32 %v251, %v297
    %v303 = vmul.f32 %v255, %v297
    %v304 = vmul.f32 %v259, %v297
    %v305 = vmul.f32 %v263, %v297
    %v306 = vmul.f32 %v267, %v297
    %v307 = vmul.f32 %v271, %v297
    %v308 = vmul.f32 %v275, %v297
    %v309 = vmul.f32 %v279, %v297
    %v310 = vmul.f32 %v283, %v297
    %v311 = vmul.f32 %v287, %v297
    %v312 = vmul.f32 %v291, %v297
    %v313 = vmul.f32 %v295, %v297
    %v314 = vadd.f32 %v217, %v298
    %v315 = vadd.f32 %v218, %v299
    %v316 = vadd.f32 %v219, %v300
    %v317 = vadd.f32 %v220, %v301
    %v318 = vadd.f32 %v221, %v302
    %v319 = vadd.f32 %v222, %v303
    %v320 = vadd.f32 %v223, %v304
    %v321 = vadd.f32 %v224, %v305
    %v322 = vadd.f32 %v225, %v306
    %v323 = vadd.f32 %v226, %v307
    %v324 = vadd.f32 %v227, %v308
    %v325 = vadd.f32 %v228, %v309
    %v326 = vadd.f32 %v229, %v310
    %v327 = vadd.f32 %v230, %v311
    %v328 = vadd.f32 %v231, %v312
    %v329 = vadd.f32 %v232, %v313
    %330 = vset.pattern.permute.xlu0 3
    %331 = vperm.xlu0 %330, %v23
    %v332 = vpop.permute.xlu0 %331
    %334 = vset.pattern.permute.xlu0 3
    %335 = vperm.xlu0 %334, %v24
    %v336 = vpop.permute.xlu0 %335
    %338 = vset.pattern.permute.xlu0 3
    %339 = vperm.xlu0 %338, %v25
    %v340 = vpop.permute.xlu0 %339
    %342 = vset.pattern.permute.xlu0 3
    %343 = vperm.xlu0 %342, %v26
    %v344 = vpop.permute.xlu0 %343
    %346 = vset.pattern.permute.xlu0 3
    %347 = vperm.xlu0 %346, %v27
    %v348 = vpop.permute.xlu0 %347
    %350 = vset.pattern.permute.xlu0 3
    %351 = vperm.xlu0 %350, %v28
    %v352 = vpop.permute.xlu0 %351
    %354 = vset.pattern.permute.xlu0 3
    %355 = vperm.xlu0 %354, %v29
    %v356 = vpop.permute.xlu0 %355
    %358 = vset.pattern.permute.xlu0 3
    %359 = vperm.xlu0 %358, %v30
    %v360 = vpop.permute.xlu0 %359
    %362 = vset.pattern.permute.xlu0 3
    %363 = vperm.xlu0 %362, %v31
    %v364 = vpop.permute.xlu0 %363
    %366 = vset.pattern.permute.xlu0 3
    %367 = vperm.xlu0 %366, %v32
    %v368 = vpop.permute.xlu0 %367
    %370 = vset.pattern.permute.xlu0 3
    %371 = vperm.xlu0 %370, %v33
    %v372 = vpop.permute.xlu0 %371
    %374 = vset.pattern.permute.xlu0 3
    %375 = vperm.xlu0 %374, %v34
    %v376 = vpop.permute.xlu0 %375
    %378 = vset.pattern.permute.xlu0 3
    %379 = vperm.xlu0 %378, %v35
    %v380 = vpop.permute.xlu0 %379
    %382 = vset.pattern.permute.xlu0 3
    %383 = vperm.xlu0 %382, %v36
    %v384 = vpop.permute.xlu0 %383
    %386 = vset.pattern.permute.xlu0 3
    %387 = vperm.xlu0 %386, %v37
    %v388 = vpop.permute.xlu0 %387
    %390 = vset.pattern.permute.xlu0 3
    %391 = vperm.xlu0 %390, %v38
    %v392 = vpop.permute.xlu0 %391
    %v394 = vperm.slane %v22, 3
    %v395 = vmul.f32 %v332, %v394
    %v396 = vmul.f32 %v336, %v394
    %v397 = vmul.f32 %v340, %v394
    %v398 = vmul.f32 %v344, %v394
    %v399 = vmul.f32 %v348, %v394
    %v400 = vmul.f32 %v352, %v394
    %v401 = vmul.f32 %v356, %v394
    %v402 = vmul.f32 %v360, %v394
    %v403 = vmul.f32 %v364, %v394
    %v404 = vmul.f32 %v368, %v394
    %v405 = vmul.f32 %v372, %v394
    %v406 = vmul.f32 %v376, %v394
    %v407 = vmul.f32 %v380, %v394
    %v408 = vmul.f32 %v384, %v394
    %v409 = vmul.f32 %v388, %v394
    %v410 = vmul.f32 %v392, %v394
    %v411 = vadd.f32 %v314, %v395
    %v412 = vadd.f32 %v315, %v396
    %v413 = vadd.f32 %v316, %v397
    %v414 = vadd.f32 %v317, %v398
    %v415 = vadd.f32 %v318, %v399
    %v416 = vadd.f32 %v319, %v400
    %v417 = vadd.f32 %v320, %v401
    %v418 = vadd.f32 %v321, %v402
    %v419 = vadd.f32 %v322, %v403
    %v420 = vadd.f32 %v323, %v404
    %v421 = vadd.f32 %v324, %v405
    %v422 = vadd.f32 %v325, %v406
    %v423 = vadd.f32 %v326, %v407
    %v424 = vadd.f32 %v327, %v408
    %v425 = vadd.f32 %v328, %v409
    %v426 = vadd.f32 %v329, %v410
    %v427 = vld [vmem:[%s2] sm:$0xff]
    %v428 = vld [vmem:[%s2 + $0x8] sm:$0xff]
    %v429 = vld [vmem:[%s2 + $0x10] sm:$0xff]
    %v430 = vld [vmem:[%s2 + $0x18] sm:$0xff]
    %v431 = vld [vmem:[%s2 + $0x20] sm:$0xff]
    %v432 = vld [vmem:[%s2 + $0x28] sm:$0xff]
    %v433 = vld [vmem:[%s2 + $0x30] sm:$0xff]
    %v434 = vld [vmem:[%s2 + $0x38] sm:$0xff]
    %v435 = vld [vmem:[%s2 + $0x40] sm:$0xff]
    %v436 = vld [vmem:[%s2 + $0x48] sm:$0xff]
    %v437 = vld [vmem:[%s2 + $0x50] sm:$0xff]
    %v438 = vld [vmem:[%s2 + $0x58] sm:$0xff]
    %v439 = vld [vmem:[%s2 + $0x60] sm:$0xff]
    %v440 = vld [vmem:[%s2 + $0x68] sm:$0xff]
    %v441 = vld [vmem:[%s2 + $0x70] sm:$0xff]
    %v442 = vld [vmem:[%s2 + $0x78] sm:$0xff]
    %444 = vset.pattern.permute.xlu0 0
    %445 = vperm.xlu0 %444, %v427
    %v446 = vpop.permute.xlu0 %445
    %449 = vset.pattern.permute.xlu0 0
    %450 = vperm.xlu0 %449, %v428
    %v451 = vpop.permute.xlu0 %450
    %454 = vset.pattern.permute.xlu0 0
    %455 = vperm.xlu0 %454, %v429
    %v456 = vpop.permute.xlu0 %455
    %459 = vset.pattern.permute.xlu0 0
    %460 = vperm.xlu0 %459, %v430
    %v461 = vpop.permute.xlu0 %460
    %464 = vset.pattern.permute.xlu0 0
    %465 = vperm.xlu0 %464, %v431
    %v466 = vpop.permute.xlu0 %465
    %469 = vset.pattern.permute.xlu0 0
    %470 = vperm.xlu0 %469, %v432
    %v471 = vpop.permute.xlu0 %470
    %474 = vset.pattern.permute.xlu0 0
    %475 = vperm.xlu0 %474, %v433
    %v476 = vpop.permute.xlu0 %475
    %479 = vset.pattern.permute.xlu0 0
    %480 = vperm.xlu0 %479, %v434
    %v481 = vpop.permute.xlu0 %480
    %484 = vset.pattern.permute.xlu0 0
    %485 = vperm.xlu0 %484, %v435
    %v486 = vpop.permute.xlu0 %485
    %489 = vset.pattern.permute.xlu0 0
    %490 = vperm.xlu0 %489, %v436
    %v491 = vpop.permute.xlu0 %490
    %494 = vset.pattern.permute.xlu0 0
    %495 = vperm.xlu0 %494, %v437
    %v496 = vpop.permute.xlu0 %495
    %499 = vset.pattern.permute.xlu0 0
    %500 = vperm.xlu0 %499, %v438
    %v501 = vpop.permute.xlu0 %500
    %504 = vset.pattern.permute.xlu0 0
    %505 = vperm.xlu0 %504, %v439
    %v506 = vpop.permute.xlu0 %505
    %509 = vset.pattern.permute.xlu0 0
    %510 = vperm.xlu0 %509, %v440
    %v511 = vpop.permute.xlu0 %510
    %514 = vset.pattern.permute.xlu0 0
    %515 = vperm.xlu0 %514, %v441
    %v516 = vpop.permute.xlu0 %515
    %519 = vset.pattern.permute.xlu0 0
    %520 = vperm.xlu0 %519, %v442
    %v521 = vpop.permute.xlu0 %520
    %v523 = vadd.f32 %v411, %v446
    %v524 = vadd.f32 %v412, %v451
    %v525 = vadd.f32 %v413, %v456
    %v526 = vadd.f32 %v414, %v461
    %v527 = vadd.f32 %v415, %v466
    %v528 = vadd.f32 %v416, %v471
    %v529 = vadd.f32 %v417, %v476
    %v530 = vadd.f32 %v418, %v481
    %v531 = vadd.f32 %v419, %v486
    %v532 = vadd.f32 %v420, %v491
    %v533 = vadd.f32 %v421, %v496
    %v534 = vadd.f32 %v422, %v501
    %v535 = vadd.f32 %v423, %v506
    %v536 = vadd.f32 %v424, %v511
    %v537 = vadd.f32 %v425, %v516
    %v538 = vadd.f32 %v426, %v521
    %v539 = vmax.f32 %v523, 0.0
    %v540 = vmax.f32 %v524, 0.0
    %v541 = vmax.f32 %v525, 0.0
    %v542 = vmax.f32 %v526, 0.0
    %v543 = vmax.f32 %v527, 0.0
    %v544 = vmax.f32 %v528, 0.0
    %v545 = vmax.f32 %v529, 0.0
    %v546 = vmax.f32 %v530, 0.0
    %v547 = vmax.f32 %v531, 0.0
    %v548 = vmax.f32 %v532, 0.0
    %v549 = vmax.f32 %v533, 0.0
    %v550 = vmax.f32 %v534, 0.0
    %v551 = vmax.f32 %v535, 0.0
    %v552 = vmax.f32 %v536, 0.0
    %v553 = vmax.f32 %v537, 0.0
    %v554 = vmax.f32 %v538, 0.0
    %v555 = vld [vmem:[%s3] sm:$0xff]
    %v556 = vld [vmem:[%s3 + $0x8] sm:$0xff]
    %v557 = vld [vmem:[%s3 + $0x10] sm:$0xff]
    %v558 = vld [vmem:[%s3 + $0x18] sm:$0xff]
    %v559 = vld [vmem:[%s3 + $0x20] sm:$0xff]
    %v560 = vld [vmem:[%s3 + $0x28] sm:$0xff]
    %v561 = vld [vmem:[%s3 + $0x30] sm:$0xff]
    %v562 = vld [vmem:[%s3 + $0x38] sm:$0xff]
    %v563 = vld [vmem:[%s3 + $0x40] sm:$0xff]
    %v564 = vld [vmem:[%s3 + $0x48] sm:$0xff]
    %v565 = vld [vmem:[%s3 + $0x50] sm:$0xff]
    %v566 = vld [vmem:[%s3 + $0x58] sm:$0xff]
    %v567 = vld [vmem:[%s3 + $0x60] sm:$0xff]
    %v568 = vld [vmem:[%s3 + $0x68] sm:$0xff]
    %v569 = vld [vmem:[%s3 + $0x70] sm:$0xff]
    %v570 = vld [vmem:[%s3 + $0x78] sm:$0xff]
    %572 = vset.pattern.permute.xlu0 0
    %573 = vperm.xlu0 %572, %v555
    %v574 = vpop.permute.xlu0 %573
    %577 = vset.pattern.permute.xlu0 0
    %578 = vperm.xlu0 %577, %v556
    %v579 = vpop.permute.xlu0 %578
    %582 = vset.pattern.permute.xlu0 0
    %583 = vperm.xlu0 %582, %v557
    %v584 = vpop.permute.xlu0 %583
    %587 = vset.pattern.permute.xlu0 0
    %588 = vperm.xlu0 %587, %v558
    %v589 = vpop.permute.xlu0 %588
    %592 = vset.pattern.permute.xlu0 0
    %593 = vperm.xlu0 %592, %v559
    %v594 = vpop.permute.xlu0 %593
    %597 = vset.pattern.permute.xlu0 0
    %598 = vperm.xlu0 %597, %v560
    %v599 = vpop.permute.xlu0 %598
    %602 = vset.pattern.permute.xlu0 0
    %603 = vperm.xlu0 %602, %v561
    %v604 = vpop.permute.xlu0 %603
    %607 = vset.pattern.permute.xlu0 0
    %608 = vperm.xlu0 %607, %v562
    %v609 = vpop.permute.xlu0 %608
    %612 = vset.pattern.permute.xlu0 0
    %613 = vperm.xlu0 %612, %v563
    %v614 = vpop.permute.xlu0 %613
    %617 = vset.pattern.permute.xlu0 0
    %618 = vperm.xlu0 %617, %v564
    %v619 = vpop.permute.xlu0 %618
    %622 = vset.pattern.permute.xlu0 0
    %623 = vperm.xlu0 %622, %v565
    %v624 = vpop.permute.xlu0 %623
    %627 = vset.pattern.permute.xlu0 0
    %628 = vperm.xlu0 %627, %v566
    %v629 = vpop.permute.xlu0 %628
    %632 = vset.pattern.permute.xlu0 0
    %633 = vperm.xlu0 %632, %v567
    %v634 = vpop.permute.xlu0 %633
    %637 = vset.pattern.permute.xlu0 0
    %638 = vperm.xlu0 %637, %v568
    %v639 = vpop.permute.xlu0 %638
    %642 = vset.pattern.permute.xlu0 0
    %643 = vperm.xlu0 %642, %v569
    %v644 = vpop.permute.xlu0 %643
    %647 = vset.pattern.permute.xlu0 0
    %648 = vperm.xlu0 %647, %v570
    %v649 = vpop.permute.xlu0 %648
    %v651 = vmul.f32 %v539, %v574
    %v652 = vmul.f32 %v540, %v579
    %v653 = vmul.f32 %v541, %v584
    %v654 = vmul.f32 %v542, %v589
    %v655 = vmul.f32 %v543, %v594
    %v656 = vmul.f32 %v544, %v599
    %v657 = vmul.f32 %v545, %v604
    %v658 = vmul.f32 %v546, %v609
    %v659 = vmul.f32 %v547, %v614
    %v660 = vmul.f32 %v548, %v619
    %v661 = vmul.f32 %v549, %v624
    %v662 = vmul.f32 %v550, %v629
    %v663 = vmul.f32 %v551, %v634
    %v664 = vmul.f32 %v552, %v639
    %v665 = vmul.f32 %v553, %v644
    %v666 = vmul.f32 %v554, %v649
    %v667 = vadd.f32 %v651, %v652
    %v668 = vadd.f32 %v667, %v653
    %v669 = vadd.f32 %v668, %v654
    %v670 = vadd.f32 %v669, %v655
    %v671 = vadd.f32 %v670, %v656
    %v672 = vadd.f32 %v671, %v657
    %v673 = vadd.f32 %v672, %v658
    %v674 = vadd.f32 %v673, %v659
    %v675 = vadd.f32 %v674, %v660
    %v676 = vadd.f32 %v675, %v661
    %v677 = vadd.f32 %v676, %v662
    %v678 = vadd.f32 %v677, %v663
    %v679 = vadd.f32 %v678, %v664
    %v680 = vadd.f32 %v679, %v665
    %v681 = vadd.f32 %v680, %v666
    %v682 = vrot.slane %v681, 4
    %v683 = vadd.f32 %v681, %v682
    %v684 = vrot.slane %v683, 2
    %v685 = vadd.f32 %v683, %v684
    %v686 = vrot.slane %v685, 1
    %v687 = vadd.f32 %v685, %v686
    %s688 = sld [smem:[#allocation2]]
    %v689 = vstv %s688
    %v690 = vadd.f32 %v687, %v689
    %691 = vst [vmem:[#allocation3] sm:$0x1] %v690
    // Predicated region
    $region22: #{tpu_custom_call.1} parent=1 // pred_check
      _
    $region23: #{tpu_custom_call.1} parent=1 // pred_check_branch
      %693 = sbr.rel (0) target = $region25
    $region24: #{tpu_custom_call.1} parent=1 // pred_region
      %695 = vsyncadd [#allocation4], 0
      %s697 = sshll.u32 [#allocation3], 4
      %s698 = int_to_ptr.vmem [resolvable:$true] %s697
      %s699 = sshll.u32 %s5, 4
      %s700 = int_to_ptr.hbm [resolvable:$true] %s699
      %702 = dma.vmem_to_hbm [thread:$0]  %s698, 16, %s700, [#allocation4]
    $region25: #{tpu_custom_call.1} parent=1 // pred_fallthru
      _
    // Predicated region
    $region26: #{tpu_custom_call.1} parent=1 // pred_check
      _
    $region27: #{tpu_custom_call.1} parent=1 // pred_check_branch
      %704 = sbr.rel (0) target = $region29
    $region28: #{tpu_custom_call.1} parent=1 // pred_region
      %706 = dma.done [#allocation4], 16
    $region29: #{tpu_custom_call.1} parent=1 // pred_fallthru
      _
    %707 = vsyncpa [#allocation4], 1

</llo_original>
